<compile_context>
chip_gen: v6e
topology: v6e:2x2x1
jax: 0.10.0
libtpu: 0.0.40
codegen_flags: <defaults>
</compile_context>

<pallas_src>
import functools

import jax
import jax.numpy as jnp
from jax.experimental import pallas as pl
from jax.experimental.pallas import tpu as pltpu

_LANE = 128
_LOG_FLUSH_EVERY = 8   # flush running Jacobian product into log() every N layers


def planar_chain_kernel(z_ref, w_ref, u_ref, b_ref, wu_ref, z_out_ref, slj_ref):
    """Whole planar-flow chain for one batch tile, batch-in-lanes layout.

    z_ref:    (D, TB)  VMEM  -- feature dim on sublanes, batch on lanes
    w_ref:    (D, L)   VMEM  -- W^T, resident across grid steps
    u_ref:    (D, L)   VMEM  -- U_hat^T, resident across grid steps
    b_ref:    (L,)     SMEM  -- per-layer scalar bias
    wu_ref:   (L,)     SMEM  -- per-layer scalar w_l . u_hat_l
    z_out_ref:(D, TB)  VMEM
    slj_ref:  (1, TB)  VMEM  -- lane-dense sum-log-|det J|
    """
    z = z_ref[...].astype(jnp.float32)                      # (D, TB)
    tb = z.shape[1]
    num_layers = w_ref.shape[1]

    slj = jnp.zeros((1, tb), jnp.float32)
    prod = jnp.ones((1, tb), jnp.float32)
    # flow_length is small & static -> fully unrolled Python loop (LLO visible).
    for l in range(num_layers):
        w_col = w_ref[:, pl.ds(l, 1)].astype(jnp.float32)   # (D, 1)
        u_col = u_ref[:, pl.ds(l, 1)].astype(jnp.float32)   # (D, 1)
        b_l = b_ref[l]                                       # SMEM scalar
        wu_l = wu_ref[l]                                     # SMEM scalar
        # act = tanh(w_l . z + b_l): sublane reduce (XLU) + EUP tanh -> (1, TB)
        act = jnp.tanh(jnp.sum(z * w_col, axis=0, keepdims=True) + b_l)
        z = z + u_col * act                                  # (D,1)*(1,TB) broadcast
        # |det J| factor, accumulated as a running product (one log per flush).
        prod = prod * (1.0 + wu_l * (1.0 - act * act))
        if (l + 1) % _LOG_FLUSH_EVERY == 0:
            slj = slj + jnp.log(jnp.abs(prod))
            prod = jnp.ones((1, tb), jnp.float32)
    if num_layers % _LOG_FLUSH_EVERY != 0:
        slj = slj + jnp.log(jnp.abs(prod))

    z_out_ref[...] = z.astype(z_out_ref.dtype)
    slj_ref[...] = slj


@functools.partial(jax.jit, static_argnames=("tile_b",))
def planar_flow_forward(z, W, U_hat, biases, wu, *, tile_b=2048):
    """NormalizingFlowDensity.forward for planar flows.  Returns (z_out, slj)."""
    B, D = z.shape
    L = W.shape[0]

    # ---- batch tile choice: multiple of 128 lanes, keep >= 2 grid steps ----
    b_aligned = ((B + _LANE - 1) // _LANE) * _LANE
    tb = min(tile_b, b_aligned)
    if b_aligned >= 2 * _LANE:              # >=2 steps so v7x megacore can split
        tb = min(tb, b_aligned // 2)
    tb = max(_LANE, (tb // _LANE) * _LANE)  # multiple of 128 (lane-dense)
    b_pad = ((B + tb - 1) // tb) * tb
    grid = (b_pad // tb,)

    # ---- layout plumbing in plain JAX: batch-in-lanes + padding ----
    z_t = jnp.zeros((D, b_pad), z.dtype).at[:, :B].set(z.T)   # (D, Bp)
    W_t = W.T.astype(jnp.float32)                              # (D, L)
    U_t = U_hat.T.astype(jnp.float32)                          # (D, L)
    b_s = biases.reshape(L).astype(jnp.float32)                # (L,) scalars
    wu_s = wu.reshape(L).astype(jnp.float32)                   # (L,) scalars

    z_out_t, slj2d = pl.pallas_call(
        planar_chain_kernel,
        out_shape=(
            jax.ShapeDtypeStruct((D, b_pad), z.dtype),
            jax.ShapeDtypeStruct((1, b_pad), jnp.float32),
        ),
        grid_spec=pltpu.PrefetchScalarGridSpec(
            num_scalar_prefetch=0,
            grid=grid,
            in_specs=[
                pl.BlockSpec((D, tb), lambda i: (0, i)),            # z tile
                pl.BlockSpec((D, L), lambda i: (0, 0)),             # W^T (resident)
                pl.BlockSpec((D, L), lambda i: (0, 0)),             # U_hat^T
                pl.BlockSpec(memory_space=pltpu.MemorySpace.SMEM),  # biases
                pl.BlockSpec(memory_space=pltpu.MemorySpace.SMEM),  # w . u_hat
            ],
            out_specs=[
                pl.BlockSpec((D, tb), lambda i: (0, i)),            # z out
                pl.BlockSpec((1, tb), lambda i: (0, i)),            # slj (lane-dense)
            ],
        ),
        input_output_aliases={0: 0},   # reuse z HBM buffer for z_out
        compiler_params=pltpu.CompilerParams(
            dimension_semantics=("parallel",),
            vmem_limit_bytes=32 * 1024 * 1024,
        ),
    )(z_t, W_t, U_t, b_s, wu_s)

    # Back to the module's (B, D) / (B,) interface.
    return z_out_t[:, :B].T, slj2d[0, :B]


def make_planar_params(key, dim, flow_length):
    """Deterministic parameter init mimicking pyro Planar.reset_parameters()."""
    stdv = 1.0 / jnp.sqrt(jnp.float32(dim))
    kw, ku = jax.random.split(key)
    W = jax.random.uniform(kw, (flow_length, dim), jnp.float32, -stdv, stdv)
    U = jax.random.uniform(ku, (flow_length, dim), jnp.float32, -stdv, stdv)
    biases = jnp.zeros((flow_length, 1), jnp.float32)
    # u_hat reparameterization (once per parameter set -> plain-JAX glue).
    alpha = jnp.sum(W * U, axis=-1, keepdims=True)                        # (L,1)
    a_prime = -1.0 + jax.nn.softplus(alpha)
    U_hat = U + (a_prime - alpha) * W / jnp.sum(W * W, axis=-1, keepdims=True)
    wu = jnp.sum(W * U_hat, axis=-1, keepdims=True)                       # (L,1)
    return W, U_hat, biases, wu


def reference_forward(z, W, U_hat, biases, wu):
    """Pure-JAX reference of the PyTorch/pyro forward (for verification)."""
    slj = jnp.zeros((z.shape[0],), jnp.float32)
    for l in range(W.shape[0]):
        act = jnp.tanh(z @ W[l] + biases[l, 0])[:, None]                  # (B,1)
        z = z + U_hat[l][None, :] * act
        slj = slj + jnp.log(jnp.abs(1.0 + wu[l, 0] * (1.0 - act[:, 0] ** 2)))
    return z, slj


if __name__ == "__main__":
    dim = 16
    flow_length = 4
    batch = 512   # small demo batch; grid still has 2 parallel steps

    key = jax.random.PRNGKey(0)
    kz, kp = jax.random.split(key)
    z = jax.random.normal(kz, (batch, dim), jnp.float32)
    W, U_hat, biases, wu = make_planar_params(kp, dim, flow_length)

    z_out, slj = planar_flow_forward(z, W, U_hat, biases, wu)
    jax.block_until_ready((z_out, slj))

    z_ref, slj_ref = reference_forward(z, W, U_hat, biases, wu)
    assert jnp.allclose(z_out, z_ref, atol=1e-5, rtol=1e-5)
    assert jnp.allclose(slj, slj_ref, atol=1e-5, rtol=1e-5)

    # TODO(synk): 'radial_flow' and 'iaf_flow' branches of the module are not
    # implemented; only the default 'planar_flow' forward is kernelized.
    print("KERNEL_OK")
</pallas_src>

<mosaic_0001>
module attributes {stable_mosaic.version = 11 : i64} {
  func.func @planar_chain_kernel(%arg0: i32, %arg1: memref<16x256xf32, #tpu.memory_space<vmem>>, %arg2: memref<16x4xf32, #tpu.memory_space<vmem>>, %arg3: memref<16x4xf32, #tpu.memory_space<vmem>>, %arg4: memref<4xf32, #tpu.memory_space<smem>>, %arg5: memref<4xf32, #tpu.memory_space<smem>>, %arg6: memref<16x256xf32, #tpu.memory_space<vmem>>, %arg7: memref<1x256xf32, #tpu.memory_space<vmem>>) attributes {dimension_semantics = [#tpu.dimension_semantics<parallel>], iteration_bounds = array<i64: 2>, scalar_prefetch = 0 : i64, scratch_operands = 0 : i64, tpu.core_type = #tpu.core_type<tc>, window_params = [{transform_indices = @transform_0, window_bounds = array<i64: 16, 256>}, {pipeline_mode = #tpu.pipeline_mode<synchronous>, transform_indices = @transform_1, window_bounds = array<i64: 16, 4>}, {pipeline_mode = #tpu.pipeline_mode<synchronous>, transform_indices = @transform_2, window_bounds = array<i64: 16, 4>}, {transform_indices = @transform_3, window_bounds = array<i64: 4>}, {transform_indices = @transform_4, window_bounds = array<i64: 4>}, {transform_indices = @transform_5, window_bounds = array<i64: 16, 256>}, {transform_indices = @transform_6, window_bounds = array<i64: 1, 256>}]} {
    %c0 = arith.constant 0 : index
    %c0_0 = arith.constant 0 : index
    %0 = vector.load %arg1[%c0, %c0_0] : memref<16x256xf32, #tpu.memory_space<vmem>>, vector<16x256xf32>
    %cst = arith.constant 0.000000e+00 : f32
    %1 = vector.broadcast %cst : f32 to vector<1x256xf32>
    %cst_1 = arith.constant 1.000000e+00 : f32
    %2 = vector.broadcast %cst_1 : f32 to vector<1x256xf32>
    %c0_2 = arith.constant 0 : index
    %c0_3 = arith.constant 0 : index
    %3 = vector.load %arg2[%c0_2, %c0_3] : memref<16x4xf32, #tpu.memory_space<vmem>>, vector<16x1xf32>
    %c0_4 = arith.constant 0 : index
    %c0_5 = arith.constant 0 : index
    %4 = vector.load %arg3[%c0_4, %c0_5] : memref<16x4xf32, #tpu.memory_space<vmem>>, vector<16x1xf32>
    %c0_6 = arith.constant 0 : index
    %5 = memref.load %arg4[%c0_6] : memref<4xf32, #tpu.memory_space<smem>>
    %c0_7 = arith.constant 0 : index
    %6 = memref.load %arg5[%c0_7] : memref<4xf32, #tpu.memory_space<smem>>
    %7 = vector.broadcast %3 : vector<16x1xf32> to vector<16x256xf32>
    %8 = arith.mulf %0, %7 : vector<16x256xf32>
    %cst_8 = arith.constant dense<0.000000e+00> : vector<256xf32>
    %9 = vector.multi_reduction <add>, %8, %cst_8 [0] : vector<16x256xf32> to vector<256xf32>
    %10 = vector.shape_cast %9 : vector<256xf32> to vector<1x256xf32>
    %11 = vector.broadcast %5 : f32 to vector<1x256xf32>
    %12 = arith.addf %10, %11 : vector<1x256xf32>
    %13 = math.tanh %12 : vector<1x256xf32>
    %14 = vector.broadcast %4 : vector<16x1xf32> to vector<16x256xf32>
    %15 = vector.broadcast %13 : vector<1x256xf32> to vector<16x256xf32>
    %16 = arith.mulf %14, %15 : vector<16x256xf32>
    %17 = arith.addf %0, %16 : vector<16x256xf32>
    %18 = arith.mulf %13, %13 : vector<1x256xf32>
    %cst_9 = arith.constant 1.000000e+00 : f32
    %19 = vector.broadcast %cst_9 : f32 to vector<1x256xf32>
    %20 = arith.subf %19, %18 : vector<1x256xf32>
    %21 = vector.broadcast %6 : f32 to vector<1x256xf32>
    %22 = arith.mulf %21, %20 : vector<1x256xf32>
    %cst_10 = arith.constant 1.000000e+00 : f32
    %23 = vector.broadcast %cst_10 : f32 to vector<1x256xf32>
    %24 = arith.addf %23, %22 : vector<1x256xf32>
    %25 = arith.mulf %2, %24 : vector<1x256xf32>
    %c0_11 = arith.constant 0 : index
    %c1 = arith.constant 1 : index
    %26 = vector.load %arg2[%c0_11, %c1] : memref<16x4xf32, #tpu.memory_space<vmem>>, vector<16x1xf32>
    %c0_12 = arith.constant 0 : index
    %c1_13 = arith.constant 1 : index
    %27 = vector.load %arg3[%c0_12, %c1_13] : memref<16x4xf32, #tpu.memory_space<vmem>>, vector<16x1xf32>
    %c1_14 = arith.constant 1 : index
    %28 = memref.load %arg4[%c1_14] : memref<4xf32, #tpu.memory_space<smem>>
    %c1_15 = arith.constant 1 : index
    %29 = memref.load %arg5[%c1_15] : memref<4xf32, #tpu.memory_space<smem>>
    %30 = vector.broadcast %26 : vector<16x1xf32> to vector<16x256xf32>
    %31 = arith.mulf %17, %30 : vector<16x256xf32>
    %cst_16 = arith.constant dense<0.000000e+00> : vector<256xf32>
    %32 = vector.multi_reduction <add>, %31, %cst_16 [0] : vector<16x256xf32> to vector<256xf32>
    %33 = vector.shape_cast %32 : vector<256xf32> to vector<1x256xf32>
    %34 = vector.broadcast %28 : f32 to vector<1x256xf32>
    %35 = arith.addf %33, %34 : vector<1x256xf32>
    %36 = math.tanh %35 : vector<1x256xf32>
    %37 = vector.broadcast %27 : vector<16x1xf32> to vector<16x256xf32>
    %38 = vector.broadcast %36 : vector<1x256xf32> to vector<16x256xf32>
    %39 = arith.mulf %37, %38 : vector<16x256xf32>
    %40 = arith.addf %17, %39 : vector<16x256xf32>
    %41 = arith.mulf %36, %36 : vector<1x256xf32>
    %cst_17 = arith.constant 1.000000e+00 : f32
    %42 = vector.broadcast %cst_17 : f32 to vector<1x256xf32>
    %43 = arith.subf %42, %41 : vector<1x256xf32>
    %44 = vector.broadcast %29 : f32 to vector<1x256xf32>
    %45 = arith.mulf %44, %43 : vector<1x256xf32>
    %cst_18 = arith.constant 1.000000e+00 : f32
    %46 = vector.broadcast %cst_18 : f32 to vector<1x256xf32>
    %47 = arith.addf %46, %45 : vector<1x256xf32>
    %48 = arith.mulf %25, %47 : vector<1x256xf32>
    %c0_19 = arith.constant 0 : index
    %c2 = arith.constant 2 : index
    %49 = vector.load %arg2[%c0_19, %c2] : memref<16x4xf32, #tpu.memory_space<vmem>>, vector<16x1xf32>
    %c0_20 = arith.constant 0 : index
    %c2_21 = arith.constant 2 : index
    %50 = vector.load %arg3[%c0_20, %c2_21] : memref<16x4xf32, #tpu.memory_space<vmem>>, vector<16x1xf32>
    %c2_22 = arith.constant 2 : index
    %51 = memref.load %arg4[%c2_22] : memref<4xf32, #tpu.memory_space<smem>>
    %c2_23 = arith.constant 2 : index
    %52 = memref.load %arg5[%c2_23] : memref<4xf32, #tpu.memory_space<smem>>
    %53 = vector.broadcast %49 : vector<16x1xf32> to vector<16x256xf32>
    %54 = arith.mulf %40, %53 : vector<16x256xf32>
    %cst_24 = arith.constant dense<0.000000e+00> : vector<256xf32>
    %55 = vector.multi_reduction <add>, %54, %cst_24 [0] : vector<16x256xf32> to vector<256xf32>
    %56 = vector.shape_cast %55 : vector<256xf32> to vector<1x256xf32>
    %57 = vector.broadcast %51 : f32 to vector<1x256xf32>
    %58 = arith.addf %56, %57 : vector<1x256xf32>
    %59 = math.tanh %58 : vector<1x256xf32>
    %60 = vector.broadcast %50 : vector<16x1xf32> to vector<16x256xf32>
    %61 = vector.broadcast %59 : vector<1x256xf32> to vector<16x256xf32>
    %62 = arith.mulf %60, %61 : vector<16x256xf32>
    %63 = arith.addf %40, %62 : vector<16x256xf32>
    %64 = arith.mulf %59, %59 : vector<1x256xf32>
    %cst_25 = arith.constant 1.000000e+00 : f32
    %65 = vector.broadcast %cst_25 : f32 to vector<1x256xf32>
    %66 = arith.subf %65, %64 : vector<1x256xf32>
    %67 = vector.broadcast %52 : f32 to vector<1x256xf32>
    %68 = arith.mulf %67, %66 : vector<1x256xf32>
    %cst_26 = arith.constant 1.000000e+00 : f32
    %69 = vector.broadcast %cst_26 : f32 to vector<1x256xf32>
    %70 = arith.addf %69, %68 : vector<1x256xf32>
    %71 = arith.mulf %48, %70 : vector<1x256xf32>
    %c0_27 = arith.constant 0 : index
    %c3 = arith.constant 3 : index
    %72 = vector.load %arg2[%c0_27, %c3] : memref<16x4xf32, #tpu.memory_space<vmem>>, vector<16x1xf32>
    %c0_28 = arith.constant 0 : index
    %c3_29 = arith.constant 3 : index
    %73 = vector.load %arg3[%c0_28, %c3_29] : memref<16x4xf32, #tpu.memory_space<vmem>>, vector<16x1xf32>
    %c3_30 = arith.constant 3 : index
    %74 = memref.load %arg4[%c3_30] : memref<4xf32, #tpu.memory_space<smem>>
    %c3_31 = arith.constant 3 : index
    %75 = memref.load %arg5[%c3_31] : memref<4xf32, #tpu.memory_space<smem>>
    %76 = vector.broadcast %72 : vector<16x1xf32> to vector<16x256xf32>
    %77 = arith.mulf %63, %76 : vector<16x256xf32>
    %cst_32 = arith.constant dense<0.000000e+00> : vector<256xf32>
    %78 = vector.multi_reduction <add>, %77, %cst_32 [0] : vector<16x256xf32> to vector<256xf32>
    %79 = vector.shape_cast %78 : vector<256xf32> to vector<1x256xf32>
    %80 = vector.broadcast %74 : f32 to vector<1x256xf32>
    %81 = arith.addf %79, %80 : vector<1x256xf32>
    %82 = math.tanh %81 : vector<1x256xf32>
    %83 = vector.broadcast %73 : vector<16x1xf32> to vector<16x256xf32>
    %84 = vector.broadcast %82 : vector<1x256xf32> to vector<16x256xf32>
    %85 = arith.mulf %83, %84 : vector<16x256xf32>
    %86 = arith.addf %63, %85 : vector<16x256xf32>
    %87 = arith.mulf %82, %82 : vector<1x256xf32>
    %cst_33 = arith.constant 1.000000e+00 : f32
    %88 = vector.broadcast %cst_33 : f32 to vector<1x256xf32>
    %89 = arith.subf %88, %87 : vector<1x256xf32>
    %90 = vector.broadcast %75 : f32 to vector<1x256xf32>
    %91 = arith.mulf %90, %89 : vector<1x256xf32>
    %cst_34 = arith.constant 1.000000e+00 : f32
    %92 = vector.broadcast %cst_34 : f32 to vector<1x256xf32>
    %93 = arith.addf %92, %91 : vector<1x256xf32>
    %94 = arith.mulf %71, %93 : vector<1x256xf32>
    %95 = math.absf %94 : vector<1x256xf32>
    %96 = math.log %95 : vector<1x256xf32>
    %97 = arith.addf %1, %96 : vector<1x256xf32>
    %c0_35 = arith.constant 0 : index
    %c0_36 = arith.constant 0 : index
    %98 = vector.load %arg6[%c0_35, %c0_36] : memref<16x256xf32, #tpu.memory_space<vmem>>, vector<16x256xf32>
    tpu.vector_store %arg6[%c0_35, %c0_36], %86 {strides = array<i32>} : memref<16x256xf32, #tpu.memory_space<vmem>>, vector<16x256xf32>,
    %c0_37 = arith.constant 0 : index
    %c0_38 = arith.constant 0 : index
    %99 = vector.load %arg7[%c0_37, %c0_38] : memref<1x256xf32, #tpu.memory_space<vmem>>, vector<1x256xf32>
    tpu.vector_store %arg7[%c0_37, %c0_38], %97 {strides = array<i32>} : memref<1x256xf32, #tpu.memory_space<vmem>>, vector<1x256xf32>,
    return
  }
  func.func @transform_0(%arg0: i32) -> (i32, i32) {
    %c0_i32 = arith.constant 0 : i32
    %c0_i32_0 = arith.constant 0 : i32
    return %c0_i32, %arg0 : i32, i32
  }
  func.func @transform_1(%arg0: i32) -> (i32, i32) {
    %c0_i32 = arith.constant 0 : i32
    %c0_i32_0 = arith.constant 0 : i32
    %c0_i32_1 = arith.constant 0 : i32
    return %c0_i32, %c0_i32_0 : i32, i32
  }
  func.func @transform_2(%arg0: i32) -> (i32, i32) {
    %c0_i32 = arith.constant 0 : i32
    %c0_i32_0 = arith.constant 0 : i32
    %c0_i32_1 = arith.constant 0 : i32
    return %c0_i32, %c0_i32_0 : i32, i32
  }
  func.func @transform_3(%arg0: i32) -> i32 {
    %c0_i32 = arith.constant 0 : i32
    %c0_i32_0 = arith.constant 0 : i32
    return %c0_i32 : i32
  }
  func.func @transform_4(%arg0: i32) -> i32 {
    %c0_i32 = arith.constant 0 : i32
    %c0_i32_0 = arith.constant 0 : i32
    return %c0_i32 : i32
  }
  func.func @transform_5(%arg0: i32) -> (i32, i32) {
    %c0_i32 = arith.constant 0 : i32
    %c0_i32_0 = arith.constant 0 : i32
    return %c0_i32, %arg0 : i32, i32
  }
  func.func @transform_6(%arg0: i32) -> (i32, i32) {
    %c0_i32 = arith.constant 0 : i32
    %c0_i32_0 = arith.constant 0 : i32
    return %c0_i32, %arg0 : i32, i32
  }
}

</mosaic_0001>

<llo_original>
// kernel: planar_flow_forward.1
$region0: #{planar_flow_forward.1}
  #allocation0 [shape = 'u32[]', space=smem, size = 0x4, offset = 0x4, fixed_abs, tag = 'smem constant byte address 0x4 - core index']
  #allocation1 [shape = 'u32[144,128]{1,0:T(1,128)}', space=vmem, size = 0x12000, scoped, tag = 'internal scratch']
  %s0 = inlined_call_operand.vmem [shape: f32[16,512], index: 0, kind: input, shape index: {}, may-alias: {0,5}]
  %s1 = inlined_call_operand.vmem [shape: f32[16,4], index: 1, kind: input, shape index: {}]
  %s2 = inlined_call_operand.vmem [shape: f32[16,4], index: 2, kind: input, shape index: {}]
  %s3 = inlined_call_operand.vmem [shape: f32[4], index: 3, kind: input, shape index: {}]
  %s4 = inlined_call_operand.vmem [shape: f32[4], index: 4, kind: input, shape index: {}]
  %s5 = inlined_call_operand.vmem [shape: f32[16,512], index: 5, kind: output, shape index: {0}, may-alias: {0,5}]
  %s6 = inlined_call_operand.hbm [shape: f32[1,512], index: 6, kind: output, shape index: {1}]
  %7 = xla_tuple %s5, %s6
  %s8 = sld [smem:[#allocation0]]
  $region111: #{planar_flow_forward.1} parent=0
    _
  %s10 = ssub.s32 1, %s8
  %s11 = scalar_select 0, %s10, %s8
  $region1: #{planar_flow_forward.1} parent=0
    #allocation2 [shape = 'u8[32768]{0}', space=vmem, size = 0x8000, scoped, tag = 'input window, operand 0']
    #allocation3 [shape = 'u8[512]{0}', space=smem, size = 0x200, scoped, tag = 'input window, operand 3, single buffered']
    #allocation4 [shape = 's32[2]{0}', space=sflag, size = 0x8, scoped, tag = 'scoped memory for planar_flow_forward.1']
    #allocation5 [shape = 's32[2]{0}', space=sflag, size = 0x8, scoped, tag = 'scoped memory for planar_flow_forward.1']
    #allocation6 [shape = 'u8[512]{0}', space=smem, size = 0x200, scoped, tag = 'input window, operand 4, single buffered']
    #allocation7 [shape = 's32[1]{0}', space=sflag, size = 0x4, scoped, tag = 'scoped memory for planar_flow_forward.1']
    #allocation8 [shape = 'u8[32768]{0}', space=vmem, size = 0x8000, scoped, tag = 'output window, operand 0']
    #allocation9 [shape = 'u8[2048]{0}', space=vmem, size = 0x800, scoped, tag = 'output window, operand 1']
    %12 = vsyncpa [#allocation5], 0
    %13 = vsyncpa [#allocation7], 0
    %14 = vsyncpa [#allocation4], 0
    %s15 = scalar_lea.sflag [#allocation4], 1
    %16 = vsyncpa %s15, 0
    loop: start=0, step=1, limit=4
    $region2: #{planar_flow_forward.1} parent=1 // loop_pre_header
      _
    $region3: #{planar_flow_forward.1} parent=1 // loop_header
      %s18 = sphi 0, %s22
      %p19 = scmp.ge.s32.totalorder %s18, 4
      %s28 = sphi 0, %s30
      %s31 = sphi 0, %s28
      %s32 = sphi 0, %s31
      %s48 = sphi 0, %s32
      %s52 = sphi 0, %s52
      %s54 = sphi 0, %s52
      %s55 = sphi 0, %s54
      %s69 = sphi 0, %s55
      %s73 = sphi 0, %s73
      %s75 = sphi 0, %s73
      %s76 = sphi 0, %s75
      %s90 = sphi 0, %s76
      %s94 = sphi 0, %s94
      %s96 = sphi 0, %s94
      %s97 = sphi 0, %s96
      %s111 = sphi 0, %s97
      %s115 = sphi 0, %s115
      %s117 = sphi 0, %s115
      %s118 = sphi 0, %s117
      %s132 = sphi 0, %s118
      %s138 = sphi 0, %s140
      %s141 = sphi 0, %s138
      %s142 = sphi 0, %s141
      %s158 = sphi 0, %s142
      %s164 = sphi 0, %s166
      %s167 = sphi 0, %s164
      %s168 = sphi 0, %s167
      %s184 = sphi 0, %s168
    $region4: #{planar_flow_forward.1} parent=1 // loop_header_branch
      %21 = sbr.rel (%p19) target = $region8
    $region5: #{planar_flow_forward.1} parent=1 // loop_body
      %s23 = ssub.s32 %s18, 1
      %s24 = ssub.s32 %s18, 2
      %s25 = sadd.s32 %s18, 1
      %s26 = ssub.s32 %s18, %s25
      %p27 = scmp.eq.s32.totalorder %s26, 0
      %s29 = sadd.s32 %s28, 1
      %s30 = scalar_select %p27, %s28, %s29
      %p33 = pneg %p27
      %p34 = scmp.eq.s32.totalorder %s18, 1
      %p35 = por %p33, %p34
      %p36 = scmp.ne.s32.totalorder %s28, %s31
      %p37 = scmp.eq.s32.totalorder %s18, 0
      %p38 = por %p36, %p37
      %p39 = scmp.ne.s32.totalorder %s28, %s31
      %p40 = scmp.eq.s32.totalorder %s23, 1
      %p41 = por %p39, %p40
      %p42 = scmp.ne.s32.totalorder %s31, %s32
      %p43 = scmp.eq.s32.totalorder %s23, 0
      %p44 = por %p42, %p43
      %p45 = scmp.ne.s32.totalorder %s31, %s32
      %p46 = scmp.eq.s32.totalorder %s24, 1
      %p47 = por %p45, %p46
      %p49 = scmp.ne.s32.totalorder %s32, %s48
      %p50 = scmp.eq.s32.totalorder %s24, 0
      %p51 = por %p49, %p50
      %s53 = sadd.s32 %s52, 1
      %p56 = scmp.eq.s32.totalorder %s18, 1
      %p57 = scmp.ne.s32.totalorder %s52, %s54
      %p58 = scmp.eq.s32.totalorder %s18, 0
      %p59 = por %p57, %p58
      %p60 = scmp.ne.s32.totalorder %s52, %s54
      %p61 = scmp.eq.s32.totalorder %s23, 1
      %p62 = por %p60, %p61
      %p63 = scmp.ne.s32.totalorder %s54, %s55
      %p64 = scmp.eq.s32.totalorder %s23, 0
      %p65 = por %p63, %p64
      %p66 = scmp.ne.s32.totalorder %s54, %s55
      %p67 = scmp.eq.s32.totalorder %s24, 1
      %p68 = por %p66, %p67
      %p70 = scmp.ne.s32.totalorder %s55, %s69
      %p71 = scmp.eq.s32.totalorder %s24, 0
      %p72 = por %p70, %p71
      %s74 = sadd.s32 %s73, 1
      %p77 = scmp.eq.s32.totalorder %s18, 1
      %p78 = scmp.ne.s32.totalorder %s73, %s75
      %p79 = scmp.eq.s32.totalorder %s18, 0
      %p80 = por %p78, %p79
      %p81 = scmp.ne.s32.totalorder %s73, %s75
      %p82 = scmp.eq.s32.totalorder %s23, 1
      %p83 = por %p81, %p82
      %p84 = scmp.ne.s32.totalorder %s75, %s76
      %p85 = scmp.eq.s32.totalorder %s23, 0
      %p86 = por %p84, %p85
      %p87 = scmp.ne.s32.totalorder %s75, %s76
      %p88 = scmp.eq.s32.totalorder %s24, 1
      %p89 = por %p87, %p88
      %p91 = scmp.ne.s32.totalorder %s76, %s90
      %p92 = scmp.eq.s32.totalorder %s24, 0
      %p93 = por %p91, %p92
      %s95 = sadd.s32 %s94, 1
      %p98 = scmp.eq.s32.totalorder %s18, 1
      %p99 = scmp.ne.s32.totalorder %s94, %s96
      %p100 = scmp.eq.s32.totalorder %s18, 0
      %p101 = por %p99, %p100
      %p102 = scmp.ne.s32.totalorder %s94, %s96
      %p103 = scmp.eq.s32.totalorder %s23, 1
      %p104 = por %p102, %p103
      %p105 = scmp.ne.s32.totalorder %s96, %s97
      %p106 = scmp.eq.s32.totalorder %s23, 0
      %p107 = por %p105, %p106
      %p108 = scmp.ne.s32.totalorder %s96, %s97
      %p109 = scmp.eq.s32.totalorder %s24, 1
      %p110 = por %p108, %p109
      %p112 = scmp.ne.s32.totalorder %s97, %s111
      %p113 = scmp.eq.s32.totalorder %s24, 0
      %p114 = por %p112, %p113
      %s116 = sadd.s32 %s115, 1
      %p119 = scmp.eq.s32.totalorder %s18, 1
      %p120 = scmp.ne.s32.totalorder %s115, %s117
      %p121 = scmp.eq.s32.totalorder %s18, 0
      %p122 = por %p120, %p121
      %p123 = scmp.ne.s32.totalorder %s115, %s117
      %p124 = scmp.eq.s32.totalorder %s23, 1
      %p125 = por %p123, %p124
      %p126 = scmp.ne.s32.totalorder %s117, %s118
      %p127 = scmp.eq.s32.totalorder %s23, 0
      %p128 = por %p126, %p127
      %p129 = scmp.ne.s32.totalorder %s117, %s118
      %p130 = scmp.eq.s32.totalorder %s24, 1
      %p131 = por %p129, %p130
      %p133 = scmp.ne.s32.totalorder %s118, %s132
      %p134 = scmp.eq.s32.totalorder %s24, 0
      %p135 = por %p133, %p134
      %s136 = ssub.s32 %s18, %s25
      %p137 = scmp.eq.s32.totalorder %s136, 0
      %s139 = sadd.s32 %s138, 1
      %s140 = scalar_select %p137, %s138, %s139
      %p143 = pneg %p137
      %p144 = scmp.eq.s32.totalorder %s18, 1
      %p145 = por %p143, %p144
      %p146 = scmp.ne.s32.totalorder %s138, %s141
      %p147 = scmp.eq.s32.totalorder %s18, 0
      %p148 = por %p146, %p147
      %p149 = scmp.ne.s32.totalorder %s138, %s141
      %p150 = scmp.eq.s32.totalorder %s23, 1
      %p151 = por %p149, %p150
      %p152 = scmp.ne.s32.totalorder %s141, %s142
      %p153 = scmp.eq.s32.totalorder %s23, 0
      %p154 = por %p152, %p153
      %p155 = scmp.ne.s32.totalorder %s141, %s142
      %p156 = scmp.eq.s32.totalorder %s24, 1
      %p157 = por %p155, %p156
      %p159 = scmp.ne.s32.totalorder %s142, %s158
      %p160 = scmp.eq.s32.totalorder %s24, 0
      %p161 = por %p159, %p160
      %s162 = ssub.s32 %s18, %s25
      %p163 = scmp.eq.s32.totalorder %s162, 0
      %s165 = sadd.s32 %s164, 1
      %s166 = scalar_select %p163, %s164, %s165
      %p169 = pneg %p163
      %p170 = scmp.eq.s32.totalorder %s18, 1
      %p171 = por %p169, %p170
      %p172 = scmp.ne.s32.totalorder %s164, %s167
      %p173 = scmp.eq.s32.totalorder %s18, 0
      %p174 = por %p172, %p173
      %p175 = scmp.ne.s32.totalorder %s164, %s167
      %p176 = scmp.eq.s32.totalorder %s23, 1
      %p177 = por %p175, %p176
      %p178 = scmp.ne.s32.totalorder %s167, %s168
      %p179 = scmp.eq.s32.totalorder %s23, 0
      %p180 = por %p178, %p179
      %p181 = scmp.ne.s32.totalorder %s167, %s168
      %p182 = scmp.eq.s32.totalorder %s24, 1
      %p183 = por %p181, %p182
      %p185 = scmp.ne.s32.totalorder %s168, %s184
      %p186 = scmp.eq.s32.totalorder %s24, 0
      %p187 = por %p185, %p186
      %p188 = scmp.le.s32.totalorder 1, %s18
      %p189 = scmp.lt.s32.totalorder %s18, 3
      %p190 = pnand %p188, %p189
      %p191 = pneg %p190
      // Predicated region
      $region9: #{planar_flow_forward.1} parent=5 // pred_check
        _
      $region10: #{planar_flow_forward.1} parent=5 // pred_check_branch
        %193 = sbr.rel (%p190) target = $region12
      $region11: #{planar_flow_forward.1} parent=5 // pred_region
        %s194 = ssub.s32 %s18, 1
        // Predicated region
        $region13: #{planar_flow_forward.1} parent=11 // pred_check
          %p195 = pneg %p65
        $region14: #{planar_flow_forward.1} parent=11 // pred_check_branch
          %197 = sbr.rel (%p195) target = $region16
        $region15: #{planar_flow_forward.1} parent=11 // pred_region
          _
        $region16: #{planar_flow_forward.1} parent=11 // pred_fallthru
          _
        // Predicated region
        $region17: #{planar_flow_forward.1} parent=11 // pred_check
          %p198 = pneg %p86
        $region18: #{planar_flow_forward.1} parent=11 // pred_check_branch
          %200 = sbr.rel (%p198) target = $region20
        $region19: #{planar_flow_forward.1} parent=11 // pred_region
          _
        $region20: #{planar_flow_forward.1} parent=11 // pred_fallthru
          _
        // Predicated region
        $region21: #{planar_flow_forward.1} parent=11 // pred_check
          %p201 = pneg %p107
        $region22: #{planar_flow_forward.1} parent=11 // pred_check_branch
          %203 = sbr.rel (%p201) target = $region24
        $region23: #{planar_flow_forward.1} parent=11 // pred_region
          %s205 = ssub.s32 16, 16
          %206 = vsyncadd [#allocation5], %s205
          %s208 = sshll.u32 %s3, 4
          %s209 = int_to_ptr.vmem [resolvable:$true] %s208
          %211 = dma.vmem_to_smem %s209, 16, [#allocation3], [#allocation5]
        $region24: #{planar_flow_forward.1} parent=11 // pred_fallthru
          _
        // Predicated region
        $region25: #{planar_flow_forward.1} parent=11 // pred_check
          %p212 = pneg %p128
        $region26: #{planar_flow_forward.1} parent=11 // pred_check_branch
          %214 = sbr.rel (%p212) target = $region28
        $region27: #{planar_flow_forward.1} parent=11 // pred_region
          %s216 = ssub.s32 16, 16
          %217 = vsyncadd [#allocation7], %s216
          %s219 = sshll.u32 %s4, 4
          %s220 = int_to_ptr.vmem [resolvable:$true] %s219
          %222 = dma.vmem_to_smem %s220, 16, [#allocation6], [#allocation7]
        $region28: #{planar_flow_forward.1} parent=11 // pred_fallthru
          _
      $region12: #{planar_flow_forward.1} parent=5 // pred_fallthru
        _
      %p223 = scmp.lt.s32.totalorder %s18, 2
      // Predicated region
      $region29: #{planar_flow_forward.1} parent=5 // pred_check
        %p224 = pneg %p223
      $region30: #{planar_flow_forward.1} parent=5 // pred_check_branch
        %226 = sbr.rel (%p224) target = $region32
      $region31: #{planar_flow_forward.1} parent=5 // pred_region
        // Predicated region
        $region33: #{planar_flow_forward.1} parent=31 // pred_check
          %p227 = pneg %p38
        $region34: #{planar_flow_forward.1} parent=31 // pred_check_branch
          %229 = sbr.rel (%p227) target = $region36
        $region35: #{planar_flow_forward.1} parent=31 // pred_region
          %s230 = sand.u32 %s28, 1
          %s231 = sand.u32 %s28, 1
          %s232 = smul.addr %s231, 32
          %s233 = scalar_lea.vmem [#allocation2], %s232
          %s234 = smul.u32 2, %s18
          %s235 = smul.addr %s234, 8
          %s236 = scalar_lea.vmem %s0, %s235
          // Predicated region
          $region37: #{planar_flow_forward.1} parent=35 // pred_check
            _
          $region38: #{planar_flow_forward.1} parent=35 // pred_check_branch
            %238 = sbr.rel (0) target = $region40
          $region39: #{planar_flow_forward.1} parent=35 // pred_region
            // Predicated region
            $region41: #{planar_flow_forward.1} parent=39 // pred_check
              _
            $region42: #{planar_flow_forward.1} parent=39 // pred_check_branch
              %240 = sbr.rel (0) target = $region44
            $region43: #{planar_flow_forward.1} parent=39 // pred_region
              loop: start=0, step=1, limit=1
              $region45: #{planar_flow_forward.1} parent=43 // loop_pre_header
                _
              $region46: #{planar_flow_forward.1} parent=43 // loop_header
                %s242 = sphi 0, %s246
                %p243 = scmp.ge.s32.totalorder %s242, 1
                %s247 = sphi %s236, %s236
                %s248 = sphi %s233, %s233
              $region47: #{planar_flow_forward.1} parent=43 // loop_header_branch
                %245 = sbr.rel (%p243) target = $region51
              $region48: #{planar_flow_forward.1} parent=43 // loop_body
                %v249 = vld [vmem:[%s247] sm:$0xff]
                %250 = vst [vmem:[%s248] sm:$0xff] %v249
                %v251 = vld [vmem:[%s247 + $0x8] sm:$0xff]
                %252 = vst [vmem:[%s248 + $0x8] sm:$0xff] %v251
                %v253 = vld [vmem:[%s247 + $0x20] sm:$0xff]
                %254 = vst [vmem:[%s248 + $0x10] sm:$0xff] %v253
                %v255 = vld [vmem:[%s247 + $0x28] sm:$0xff]
                %256 = vst [vmem:[%s248 + $0x18] sm:$0xff] %v255
              $region49: #{planar_flow_forward.1} parent=43 // loop_footer
                %s246 = sadd.s32 1, %s242
              $region50: #{planar_flow_forward.1} parent=43 // loop_footer_branch
                %241 = sbr.rel target = $region46
              $region51: #{planar_flow_forward.1} parent=43 // loop_exit
                _
            $region44: #{planar_flow_forward.1} parent=39 // pred_fallthru
              _
            // Predicated region
            $region52: #{planar_flow_forward.1} parent=39 // pred_check
              _
            $region53: #{planar_flow_forward.1} parent=39 // pred_check_branch
              %258 = sbr.rel target = $region55
            $region54: #{planar_flow_forward.1} parent=39 // pred_region
              _
            $region55: #{planar_flow_forward.1} parent=39 // pred_fallthru
              _
          $region40: #{planar_flow_forward.1} parent=35 // pred_fallthru
            _
          %259 = vnop
        $region36: #{planar_flow_forward.1} parent=31 // pred_fallthru
          _
      $region32: #{planar_flow_forward.1} parent=5 // pred_fallthru
        _
      %p260 = scmp.le.s32.totalorder 1, %s18
      %p261 = scmp.lt.s32.totalorder %s18, 3
      %p262 = pnand %p260, %p261
      %p263 = pneg %p262
      // Predicated region
      $region56: #{planar_flow_forward.1} parent=5 // pred_check
        _
      $region57: #{planar_flow_forward.1} parent=5 // pred_check_branch
        %265 = sbr.rel (%p262) target = $region59
      $region58: #{planar_flow_forward.1} parent=5 // pred_region
        %s266 = ssub.s32 %s18, 1
        %s267 = sand.u32 %s31, 1
        %s268 = sand.u32 %s31, 1
        %s269 = smul.addr %s268, 32
        %s270 = scalar_lea.vmem [#allocation2], %s269
        // Predicated region
        $region60: #{planar_flow_forward.1} parent=58 // pred_check
          %p271 = pneg %p44
        $region61: #{planar_flow_forward.1} parent=58 // pred_check_branch
          %273 = sbr.rel (%p271) target = $region63
        $region62: #{planar_flow_forward.1} parent=58 // pred_region
          _
        $region63: #{planar_flow_forward.1} parent=58 // pred_fallthru
          _
        // Predicated region
        $region64: #{planar_flow_forward.1} parent=58 // pred_check
          %p274 = pneg %p107
        $region65: #{planar_flow_forward.1} parent=58 // pred_check_branch
          %276 = sbr.rel (%p274) target = $region67
        $region66: #{planar_flow_forward.1} parent=58 // pred_region
          %277 = dma.done [#allocation5], 16
        $region67: #{planar_flow_forward.1} parent=58 // pred_fallthru
          _
        // Predicated region
        $region68: #{planar_flow_forward.1} parent=58 // pred_check
          %p278 = pneg %p128
        $region69: #{planar_flow_forward.1} parent=58 // pred_check_branch
          %280 = sbr.rel (%p278) target = $region71
        $region70: #{planar_flow_forward.1} parent=58 // pred_region
          %281 = dma.done [#allocation7], 16
        $region71: #{planar_flow_forward.1} parent=58 // pred_fallthru
          _
        %282 = sfence
        %s283 = sand.u32 %s31, 1
        %s284 = sand.u32 %s31, 1
        %s285 = smul.addr %s284, 32
        %s286 = scalar_lea.vmem [#allocation2], %s285
        %p287 = pneg %p44
        %p288 = pneg %p41
        %p289 = pneg %p65
        %p290 = pneg %p62
        %p291 = pneg %p86
        %p292 = pneg %p83
        %p293 = pneg %p107
        %p294 = pneg %p104
        %p295 = pneg %p128
        %p296 = pneg %p125
        %p297 = pneg %p154
        %p298 = pneg %p151
        %s299 = sand.u32 %s141, 1
        %s300 = sand.u32 %s141, 1
        %s301 = smul.addr %s300, 32
        %s302 = scalar_lea.vmem [#allocation8], %s301
        %p303 = pneg %p180
        %p304 = pneg %p177
        %s305 = sand.u32 %s167, 1
        %s306 = scalar_lea.sflag [#allocation4], %s305
        %s307 = sand.u32 %s167, 1
        %s308 = smul.addr %s307, 2
        %s309 = scalar_lea.vmem [#allocation9], %s308
        %s310 = smul.u32 2, %s23
        %s311 = smul.u32 2, %s23
        %s312 = smul.u32 2, %s23
        %v313 = vld [vmem:[%s270] sm:$0xff]
        %v314 = vld [vmem:[%s270 + $0x8] sm:$0xff]
        %v315 = vld [vmem:[%s270 + $0x10] sm:$0xff]
        %v316 = vld [vmem:[%s270 + $0x18] sm:$0xff]
        %v317 = vld [vmem:[%s1] sm:$0xff]
        %v318 = vld [vmem:[%s1 + $0x8] sm:$0xff]
        %v319 = vld [vmem:[%s2] sm:$0xff]
        %v320 = vld [vmem:[%s2 + $0x8] sm:$0xff]
        %s321 = sld [smem:[#allocation3]]
        %s322 = sld [smem:[#allocation6]]
        %324 = vset.pattern.permute.xlu0 0
        %325 = vperm.xlu0 %324, %v317
        %v326 = vpop.permute.xlu0 %325
        %329 = vset.pattern.permute.xlu0 0
        %330 = vperm.xlu0 %329, %v318
        %v331 = vpop.permute.xlu0 %330
        %v333 = vmul.f32 %v313, %v326
        %v334 = vmul.f32 %v314, %v326
        %v335 = vmul.f32 %v315, %v331
        %v336 = vmul.f32 %v316, %v331
        %v337 = vadd.f32 %v333, %v335
        %v338 = vrot.slane %v337, 4
        %v339 = vadd.f32 %v337, %v338
        %v340 = vrot.slane %v339, 2
        %v341 = vadd.f32 %v339, %v340
        %v342 = vrot.slane %v341, 1
        %v343 = vadd.f32 %v341, %v342
        %v344 = vadd.f32 %v334, %v336
        %v345 = vrot.slane %v344, 4
        %v346 = vadd.f32 %v344, %v345
        %v347 = vrot.slane %v346, 2
        %v348 = vadd.f32 %v346, %v347
        %v349 = vrot.slane %v348, 1
        %v350 = vadd.f32 %v348, %v349
        %v351 = vstv %s321
        %v352 = vadd.f32 %v343, %v351
        %v353 = vadd.f32 %v350, %v351
        %v354 = vtanh.pop %v352
        %v355 = vtanh.pop %v353
        %357 = vset.pattern.permute.xlu0 0
        %358 = vperm.xlu0 %357, %v319
        %v359 = vpop.permute.xlu0 %358
        %362 = vset.pattern.permute.xlu0 0
        %363 = vperm.xlu0 %362, %v320
        %v364 = vpop.permute.xlu0 %363
        %v366 = vmul.f32 %v359, %v354
        %v367 = vmul.f32 %v359, %v355
        %v368 = vmul.f32 %v364, %v354
        %v369 = vmul.f32 %v364, %v355
        %v370 = vadd.f32 %v313, %v366
        %v371 = vadd.f32 %v314, %v367
        %v372 = vadd.f32 %v315, %v368
        %v373 = vadd.f32 %v316, %v369
        %v374 = vmul.f32 %v354, %v354
        %v375 = vmul.f32 %v355, %v355
        %v376 = vsub.f32 1.0, %v374
        %v377 = vsub.f32 1.0, %v375
        %v378 = vstv %s322
        %v379 = vmul.f32 %v378, %v376
        %v380 = vmul.f32 %v378, %v377
        %v381 = vadd.f32 %v379, 1.0
        %v382 = vadd.f32 %v380, 1.0
        %s383 = sld [smem:[#allocation3 + $0x1]]
        %s384 = sld [smem:[#allocation6 + $0x1]]
        %385 = vset.pattern.permute.xlu0 1
        %386 = vperm.xlu0 %385, %v317
        %v387 = vpop.permute.xlu0 %386
        %389 = vset.pattern.permute.xlu0 1
        %390 = vperm.xlu0 %389, %v318
        %v391 = vpop.permute.xlu0 %390
        %v393 = vmul.f32 %v370, %v387
        %v394 = vmul.f32 %v371, %v387
        %v395 = vmul.f32 %v372, %v391
        %v396 = vmul.f32 %v373, %v391
        %v397 = vadd.f32 %v393, %v395
        %v398 = vrot.slane %v397, 4
        %v399 = vadd.f32 %v397, %v398
        %v400 = vrot.slane %v399, 2
        %v401 = vadd.f32 %v399, %v400
        %v402 = vrot.slane %v401, 1
        %v403 = vadd.f32 %v401, %v402
        %v404 = vadd.f32 %v394, %v396
        %v405 = vrot.slane %v404, 4
        %v406 = vadd.f32 %v404, %v405
        %v407 = vrot.slane %v406, 2
        %v408 = vadd.f32 %v406, %v407
        %v409 = vrot.slane %v408, 1
        %v410 = vadd.f32 %v408, %v409
        %v411 = vstv %s383
        %v412 = vadd.f32 %v403, %v411
        %v413 = vadd.f32 %v410, %v411
        %v414 = vtanh.pop %v412
        %v415 = vtanh.pop %v413
        %416 = vset.pattern.permute.xlu0 1
        %417 = vperm.xlu0 %416, %v319
        %v418 = vpop.permute.xlu0 %417
        %420 = vset.pattern.permute.xlu0 1
        %421 = vperm.xlu0 %420, %v320
        %v422 = vpop.permute.xlu0 %421
        %v424 = vmul.f32 %v418, %v414
        %v425 = vmul.f32 %v418, %v415
        %v426 = vmul.f32 %v422, %v414
        %v427 = vmul.f32 %v422, %v415
        %v428 = vadd.f32 %v370, %v424
        %v429 = vadd.f32 %v371, %v425
        %v430 = vadd.f32 %v372, %v426
        %v431 = vadd.f32 %v373, %v427
        %v432 = vmul.f32 %v414, %v414
        %v433 = vmul.f32 %v415, %v415
        %v434 = vsub.f32 1.0, %v432
        %v435 = vsub.f32 1.0, %v433
        %v436 = vstv %s384
        %v437 = vmul.f32 %v436, %v434
        %v438 = vmul.f32 %v436, %v435
        %v439 = vadd.f32 %v437, 1.0
        %v440 = vadd.f32 %v438, 1.0
        %v441 = vmul.f32 %v381, %v439
        %v442 = vmul.f32 %v382, %v440
        %s443 = sld [smem:[#allocation3 + $0x2]]
        %s444 = sld [smem:[#allocation6 + $0x2]]
        %445 = vset.pattern.permute.xlu0 2
        %446 = vperm.xlu0 %445, %v317
        %v447 = vpop.permute.xlu0 %446
        %449 = vset.pattern.permute.xlu0 2
        %450 = vperm.xlu0 %449, %v318
        %v451 = vpop.permute.xlu0 %450
        %v453 = vmul.f32 %v428, %v447
        %v454 = vmul.f32 %v429, %v447
        %v455 = vmul.f32 %v430, %v451
        %v456 = vmul.f32 %v431, %v451
        %v457 = vadd.f32 %v453, %v455
        %v458 = vrot.slane %v457, 4
        %v459 = vadd.f32 %v457, %v458
        %v460 = vrot.slane %v459, 2
        %v461 = vadd.f32 %v459, %v460
        %v462 = vrot.slane %v461, 1
        %v463 = vadd.f32 %v461, %v462
        %v464 = vadd.f32 %v454, %v456
        %v465 = vrot.slane %v464, 4
        %v466 = vadd.f32 %v464, %v465
        %v467 = vrot.slane %v466, 2
        %v468 = vadd.f32 %v466, %v467
        %v469 = vrot.slane %v468, 1
        %v470 = vadd.f32 %v468, %v469
        %v471 = vstv %s443
        %v472 = vadd.f32 %v463, %v471
        %v473 = vadd.f32 %v470, %v471
        %v474 = vtanh.pop %v472
        %v475 = vtanh.pop %v473
        %476 = vset.pattern.permute.xlu0 2
        %477 = vperm.xlu0 %476, %v319
        %v478 = vpop.permute.xlu0 %477
        %480 = vset.pattern.permute.xlu0 2
        %481 = vperm.xlu0 %480, %v320
        %v482 = vpop.permute.xlu0 %481
        %v484 = vmul.f32 %v478, %v474
        %v485 = vmul.f32 %v478, %v475
        %v486 = vmul.f32 %v482, %v474
        %v487 = vmul.f32 %v482, %v475
        %v488 = vadd.f32 %v428, %v484
        %v489 = vadd.f32 %v429, %v485
        %v490 = vadd.f32 %v430, %v486
        %v491 = vadd.f32 %v431, %v487
        %v492 = vmul.f32 %v474, %v474
        %v493 = vmul.f32 %v475, %v475
        %v494 = vsub.f32 1.0, %v492
        %v495 = vsub.f32 1.0, %v493
        %v496 = vstv %s444
        %v497 = vmul.f32 %v496, %v494
        %v498 = vmul.f32 %v496, %v495
        %v499 = vadd.f32 %v497, 1.0
        %v500 = vadd.f32 %v498, 1.0
        %v501 = vmul.f32 %v441, %v499
        %v502 = vmul.f32 %v442, %v500
        %s503 = sld [smem:[#allocation3 + $0x3]]
        %s504 = sld [smem:[#allocation6 + $0x3]]
        %505 = vset.pattern.permute.xlu0 3
        %506 = vperm.xlu0 %505, %v317
        %v507 = vpop.permute.xlu0 %506
        %509 = vset.pattern.permute.xlu0 3
        %510 = vperm.xlu0 %509, %v318
        %v511 = vpop.permute.xlu0 %510
        %v513 = vmul.f32 %v488, %v507
        %v514 = vmul.f32 %v489, %v507
        %v515 = vmul.f32 %v490, %v511
        %v516 = vmul.f32 %v491, %v511
        %v517 = vadd.f32 %v513, %v515
        %v518 = vrot.slane %v517, 4
        %v519 = vadd.f32 %v517, %v518
        %v520 = vrot.slane %v519, 2
        %v521 = vadd.f32 %v519, %v520
        %v522 = vrot.slane %v521, 1
        %v523 = vadd.f32 %v521, %v522
        %v524 = vadd.f32 %v514, %v516
        %v525 = vrot.slane %v524, 4
        %v526 = vadd.f32 %v524, %v525
        %v527 = vrot.slane %v526, 2
        %v528 = vadd.f32 %v526, %v527
        %v529 = vrot.slane %v528, 1
        %v530 = vadd.f32 %v528, %v529
        %v531 = vstv %s503
        %v532 = vadd.f32 %v523, %v531
        %v533 = vadd.f32 %v530, %v531
        %v534 = vtanh.pop %v532
        %v535 = vtanh.pop %v533
        %536 = vset.pattern.permute.xlu0 3
        %537 = vperm.xlu0 %536, %v319
        %v538 = vpop.permute.xlu0 %537
        %540 = vset.pattern.permute.xlu0 3
        %541 = vperm.xlu0 %540, %v320
        %v542 = vpop.permute.xlu0 %541
        %v544 = vmul.f32 %v538, %v534
        %v545 = vmul.f32 %v538, %v535
        %v546 = vmul.f32 %v542, %v534
        %v547 = vmul.f32 %v542, %v535
        %v548 = vadd.f32 %v488, %v544
        %v549 = vadd.f32 %v489, %v545
        %v550 = vadd.f32 %v490, %v546
        %v551 = vadd.f32 %v491, %v547
        %v552 = vmul.f32 %v534, %v534
        %v553 = vmul.f32 %v535, %v535
        %v554 = vsub.f32 1.0, %v552
        %v555 = vsub.f32 1.0, %v553
        %v556 = vstv %s504
        %v557 = vmul.f32 %v556, %v554
        %v558 = vmul.f32 %v556, %v555
        %v559 = vadd.f32 %v557, 1.0
        %v560 = vadd.f32 %v558, 1.0
        %v561 = vmul.f32 %v501, %v559
        %v562 = vmul.f32 %v502, %v560
        %v563 = vand.u32 2147483647, %v561
        %v564 = vand.u32 2147483647, %v562
        %v565 = vlog2.pop %v563
        %v566 = vmul.f32 %v565, 0.6931472
        %v567 = vlog2.pop %v564
        %v568 = vmul.f32 %v567, 0.6931472
        %v569 = vadd.f32 %v566, 0.0
        %v570 = vadd.f32 %v568, 0.0
        %571 = vst [vmem:[%s302] sm:$0xff] %v548
        %572 = vst [vmem:[%s302 + $0x8] sm:$0xff] %v549
        %573 = vst [vmem:[%s302 + $0x10] sm:$0xff] %v550
        %574 = vst [vmem:[%s302 + $0x18] sm:$0xff] %v551
        %v577 = vcombine.low %v569, %v570
        %v579 = vunpack.c.l.s4 1966171168
        %v580 = vunpack.c.0.s8 %v579
        %v581 = vlaneseq
        %v582 = vshrl.u32 %v581, 7
        %v583 = vsub.s32 %v580, %v582
        %v584 = vrot.slane %v577, %v583
        %v586 = vunpack.c.l.s4 1966171168
        %v587 = vunpack.c.0.s8 %v586
        %v588 = vlaneseq
        %v589 = vshrl.u32 %v588, 7
        %v590 = vsub.s32 %v587, %v589
        %v591 = vrot.slane %v584, %v590
        %v593 = vlaneseq
        %vm594 = vcmp.ge.s32.totalorder %v593, 0
        %vm595 = vcmp.lt.s32.totalorder %v593, 256
        %vm596 = vmand %vm594, %vm595
        %597 = vst.msk [vmem:[%s309] sm:$0x3] %vm596, %v591
        %s598 = sand.u32 %s141, 1
        %s599 = sand.u32 %s141, 1
        %s600 = smul.addr %s599, 32
        %s601 = scalar_lea.vmem [#allocation8], %s600
        %s602 = sand.u32 %s167, 1
        %s603 = scalar_lea.sflag [#allocation4], %s602
        %s604 = sand.u32 %s167, 1
        %s605 = smul.addr %s604, 2
        %s606 = scalar_lea.vmem [#allocation9], %s605
        // Predicated region
        $region72: #{planar_flow_forward.1} parent=58 // pred_check
          %p607 = pneg %p151
        $region73: #{planar_flow_forward.1} parent=58 // pred_check_branch
          %609 = sbr.rel (%p607) target = $region75
        $region74: #{planar_flow_forward.1} parent=58 // pred_region
          %s610 = smul.u32 2, %s23
          %s611 = smul.addr %s610, 8
          %s612 = scalar_lea.vmem %s5, %s611
          // Predicated region
          $region76: #{planar_flow_forward.1} parent=74 // pred_check
            _
          $region77: #{planar_flow_forward.1} parent=74 // pred_check_branch
            %614 = sbr.rel (0) target = $region79
          $region78: #{planar_flow_forward.1} parent=74 // pred_region
            // Predicated region
            $region80: #{planar_flow_forward.1} parent=78 // pred_check
              _
            $region81: #{planar_flow_forward.1} parent=78 // pred_check_branch
              %616 = sbr.rel (0) target = $region83
            $region82: #{planar_flow_forward.1} parent=78 // pred_region
              loop: start=0, step=1, limit=1
              $region84: #{planar_flow_forward.1} parent=82 // loop_pre_header
                _
              $region85: #{planar_flow_forward.1} parent=82 // loop_header
                %s618 = sphi 0, %s622
                %p619 = scmp.ge.s32.totalorder %s618, 1
                %s623 = sphi %s601, %s601
                %s624 = sphi %s612, %s612
              $region86: #{planar_flow_forward.1} parent=82 // loop_header_branch
                %621 = sbr.rel (%p619) target = $region90
              $region87: #{planar_flow_forward.1} parent=82 // loop_body
                %v625 = vld [vmem:[%s623] sm:$0xff]
                %626 = vst [vmem:[%s624] sm:$0xff] %v625
                %v627 = vld [vmem:[%s623 + $0x8] sm:$0xff]
                %628 = vst [vmem:[%s624 + $0x8] sm:$0xff] %v627
                %v629 = vld [vmem:[%s623 + $0x10] sm:$0xff]
                %630 = vst [vmem:[%s624 + $0x20] sm:$0xff] %v629
                %v631 = vld [vmem:[%s623 + $0x18] sm:$0xff]
                %632 = vst [vmem:[%s624 + $0x28] sm:$0xff] %v631
              $region88: #{planar_flow_forward.1} parent=82 // loop_footer
                %s622 = sadd.s32 1, %s618
              $region89: #{planar_flow_forward.1} parent=82 // loop_footer_branch
                %617 = sbr.rel target = $region85
              $region90: #{planar_flow_forward.1} parent=82 // loop_exit
                _
            $region83: #{planar_flow_forward.1} parent=78 // pred_fallthru
              _
            // Predicated region
            $region91: #{planar_flow_forward.1} parent=78 // pred_check
              _
            $region92: #{planar_flow_forward.1} parent=78 // pred_check_branch
              %634 = sbr.rel target = $region94
            $region93: #{planar_flow_forward.1} parent=78 // pred_region
              _
            $region94: #{planar_flow_forward.1} parent=78 // pred_fallthru
              _
          $region79: #{planar_flow_forward.1} parent=74 // pred_fallthru
            _
          %635 = vnop
        $region75: #{planar_flow_forward.1} parent=58 // pred_fallthru
          _
        // Predicated region
        $region95: #{planar_flow_forward.1} parent=58 // pred_check
          %p636 = pneg %p177
        $region96: #{planar_flow_forward.1} parent=58 // pred_check_branch
          %638 = sbr.rel (%p636) target = $region98
        $region97: #{planar_flow_forward.1} parent=58 // pred_region
          %s639 = smul.u32 2, %s23
          %s641 = ssub.s32 32, 32
          %642 = vsyncadd %s603, %s641
          %s643 = smul.addr %s639, 16
          %s644 = scalar_lea.hbm %s6, %s643
          %s646 = sshll.u32 %s606, 4
          %s647 = int_to_ptr.vmem [resolvable:$true] %s646
          %649 = dma.vmem_to_hbm [thread:$0]  %s647, 32, %s644, %s603
        $region98: #{planar_flow_forward.1} parent=58 // pred_fallthru
          _
      $region59: #{planar_flow_forward.1} parent=5 // pred_fallthru
        _
      %p650 = scmp.le.s32.totalorder 2, %s18
      // Predicated region
      $region99: #{planar_flow_forward.1} parent=5 // pred_check
        %p651 = pneg %p650
      $region100: #{planar_flow_forward.1} parent=5 // pred_check_branch
        %653 = sbr.rel (%p651) target = $region102
      $region101: #{planar_flow_forward.1} parent=5 // pred_region
        %s654 = ssub.s32 %s18, 2
        // Predicated region
        $region103: #{planar_flow_forward.1} parent=101 // pred_check
          %p655 = pneg %p157
        $region104: #{planar_flow_forward.1} parent=101 // pred_check_branch
          %657 = sbr.rel (%p655) target = $region106
        $region105: #{planar_flow_forward.1} parent=101 // pred_region
          %s658 = sand.u32 %s142, 1
          %s659 = sand.u32 %s142, 1
          %s660 = smul.addr %s659, 32
          %s661 = scalar_lea.vmem [#allocation8], %s660
        $region106: #{planar_flow_forward.1} parent=101 // pred_fallthru
          _
        // Predicated region
        $region107: #{planar_flow_forward.1} parent=101 // pred_check
          %p662 = pneg %p183
        $region108: #{planar_flow_forward.1} parent=101 // pred_check_branch
          %664 = sbr.rel (%p662) target = $region110
        $region109: #{planar_flow_forward.1} parent=101 // pred_region
          %s665 = sand.u32 %s168, 1
          %s666 = scalar_lea.sflag [#allocation4], %s665
          %s667 = sand.u32 %s168, 1
          %s668 = smul.addr %s667, 2
          %s669 = scalar_lea.vmem [#allocation9], %s668
          %670 = dma.done %s666, 32
        $region110: #{planar_flow_forward.1} parent=101 // pred_fallthru
          _
      $region102: #{planar_flow_forward.1} parent=5 // pred_fallthru
        _
    $region6: #{planar_flow_forward.1} parent=1 // loop_footer
      %s22 = sadd.s32 1, %s18
    $region7: #{planar_flow_forward.1} parent=1 // loop_footer_branch
      %17 = sbr.rel target = $region3
    $region8: #{planar_flow_forward.1} parent=1 // loop_exit
      _
    %671 = vsyncpa [#allocation4], 1
    %s672 = scalar_lea.sflag [#allocation4], 1
    %673 = vsyncpa %s672, 1
    %674 = vsyncpa [#allocation5], 1
    %s675 = scalar_lea.sflag [#allocation5], 1
    %676 = vsyncpa %s675, 1
    %677 = vsyncpa [#allocation7], 1

</llo_original>
